<compile_context>
chip_gen: v6e
topology: v6e:2x2x1
jax: 0.10.0
libtpu: 0.0.40
codegen_flags: <defaults>
</compile_context>

<pallas_src>
import functools

import jax
import jax.numpy as jnp
from jax import lax
from jax.experimental import pallas as pl
from jax.experimental.pallas import tpu as pltpu


def _downconv_kernel(x_ref, w_ref, sel_ref, b_ref, o_ref, *, stride, w_cropped, lsel):
    # x_ref:   (1, C, TH, s*W) input rows (f32/bf16, raw layout; lane q = kh*W + w)
    # w_ref:   (s*s, Cout, C)  bf16 per-(kh,kw) weight matrices
    # sel_ref: (Lsel, Wo)      bf16 0/1 matrix, sel[j, wo] = (j == wo*s)  (exact downsample)
    # b_ref:   (Cout, 1)       f32 bias
    # o_ref:   (1, Cout, TH, Wo) output block (NCHW)
    s = stride
    th = x_ref.shape[2]
    cout = o_ref.shape[1]
    wo = o_ref.shape[3]

    sel = sel_ref[...]            # resident, tiny
    bias = b_ref[...]

    def row_body(r, carry):
        # One output row r: the s input rows feeding it live in the s*W lanes of x_ref[0, :, r, :].
        xrow = x_ref[0, :, r, :].astype(jnp.bfloat16)                    # (C, s*W)
        acc = jnp.zeros((cout, wo), dtype=jnp.float32)
        for g in range(s * s):                                           # static, s*s is tiny
            kh, kw = g // s, g % s
            d = kh * w_cropped + kw
            xg = xrow[:, d:d + lsel]                                     # (C, Lsel) contiguous slice
            # Exact stride-s column downsample on the MXU (one term per output -> no rounding).
            xsel = jnp.dot(xg, sel,
                           preferred_element_type=jnp.float32).astype(jnp.bfloat16)   # (C, Wo)
            acc = acc + jnp.dot(w_ref[g], xsel,
                                preferred_element_type=jnp.float32)      # (Cout, Wo) f32
        out_row = jnp.maximum(acc + bias, 0.0).astype(o_ref.dtype)
        o_ref[0, :, r, :] = out_row
        return carry

    lax.fori_loop(0, th, row_body, 0)


def _round_up(v, m):
    return -(-v // m) * m


def _pick_row_tile(ho, c_in, c_out, sw, wo, n, budget_bytes):
    """Output rows per block: as large as fits the (double-buffered) VMEM budget; multiple of 8
    (or the full extent).  When N == 1 keep >= 2 row tiles so both v7x TensorCores get work."""
    if ho <= 8:
        return ho
    lane_in = _round_up(sw, 128)
    lane_out = _round_up(wo, 128)
    bytes_per_8_rows = 2 * 8 * (c_in * lane_in + c_out * lane_out) * 4   # 2x = double buffering
    th = min(ho, max(1, budget_bytes // bytes_per_8_rows) * 8)
    if n == 1 and th >= ho and ho >= 16:
        th = max(8, ((ho // 2 + 7) // 8) * 8)
        if th >= ho:
            th = max(8, ((ho - 1) // 8) * 8)
    return th


@functools.partial(jax.jit, static_argnames=("stride",))
def downconv(x, weight, bias=None, stride=2):
    """x: (N, C_in, H, W) NCHW; weight: (C_out, C_in, s, s); bias: (C_out,) or None."""
    n, c_in, h, w = x.shape
    c_out = weight.shape[0]
    s = int(stride)
    ho, wo = h // s, w // s
    wc = wo * s                       # cropped input width
    sw = s * wc                       # lanes per output row = the s input rows feeding it
    lsel = (wo - 1) * s + 1
    out_dtype = x.dtype

    if bias is None:
        bias = jnp.zeros((c_out,), jnp.float32)

    # PyTorch Conv2d silently drops trailing rows/cols that don't fill a full window.
    x = x[:, :, : ho * s, : wc]
    # Free reshape (contiguous split/merge), NOT an HBM transpose: lane q = kh*Wc + w of output
    # row ho holds x[n, c, ho*s + kh, w].
    xr = x.reshape(n, c_in, ho, sw)

    # Per-(kh, kw) weight matrices (g = kh*s + kw), bf16 for the MXU.
    wg = jnp.transpose(weight, (2, 3, 0, 1)).reshape(s * s, c_out, c_in).astype(jnp.bfloat16)
    # Exact 0/1 selection matrix performing the stride-s column downsample inside the kernel.
    sel = (jnp.arange(lsel)[:, None] == (jnp.arange(wo) * s)[None, :]).astype(jnp.bfloat16)
    b2 = bias.astype(jnp.float32).reshape(c_out, 1)

    # Generation-aware VMEM budget (v5e/v6e: 128 MiB, v7x: 64 MiB); one consistent number for
    # both the compiler limit and the tile-size derivation.
    try:
        vmem_cap = pltpu.get_tpu_info().vmem_capacity_bytes
    except Exception:                 # no TPU info available -> be conservative (v7x-sized)
        vmem_cap = 64 * 1024 * 1024
    vmem_limit = int(vmem_cap * 3 // 4)
    tile_budget = int(vmem_limit * 4 // 5)

    th = _pick_row_tile(ho, c_in, c_out, sw, wo, n, tile_budget)
    grid = (n, pl.cdiv(ho, th))
    # TODO(synk): for tiny images with huge batch, block several samples per grid step (leading
    # block dim > 1 + an inner sample loop) to amortize the ~0.35 us/step overhead further.
    # TODO(synk): for very wide images (Wo >~ 1k), tile the selection matmul along Wo so its
    # (Lsel, Wo) operand / FLOPs stay small; irrelevant at typical DownConv sizes.
    # TODO(synk): if desired, sweep pipeline_mode=pl.Buffered(3) on the x BlockSpec on v7x.

    in_itemsize = jnp.dtype(x.dtype).itemsize
    out_itemsize = jnp.dtype(out_dtype).itemsize
    cost = pl.CostEstimate(
        flops=2 * n * ho * wo * c_out * c_in * s * s            # conv proper
        + 2 * n * ho * s * s * c_in * lsel * wo,                # on-chip selection matmuls
        transcendentals=0,
        bytes_accessed=xr.size * in_itemsize + wg.size * 2 + sel.size * 2 + b2.size * 4
        + n * c_out * ho * wo * out_itemsize,
    )

    out = pl.pallas_call(
        functools.partial(_downconv_kernel, stride=s, w_cropped=wc, lsel=lsel),
        out_shape=jax.ShapeDtypeStruct((n, c_out, ho, wo), out_dtype),
        grid_spec=pltpu.PrefetchScalarGridSpec(
            num_scalar_prefetch=0,
            grid=grid,
            in_specs=[
                pl.BlockSpec((1, c_in, th, sw), lambda i, j: (i, 0, j, 0)),   # raw input rows
                pl.BlockSpec((s * s, c_out, c_in), lambda i, j: (0, 0, 0)),   # weights, resident
                pl.BlockSpec((lsel, wo), lambda i, j: (0, 0)),                # selection, resident
                pl.BlockSpec((c_out, 1), lambda i, j: (0, 0)),                # bias, resident
            ],
            out_specs=pl.BlockSpec((1, c_out, th, wo), lambda i, j: (i, 0, j, 0)),
        ),
        compiler_params=pltpu.CompilerParams(
            dimension_semantics=("parallel", "parallel"),
            vmem_limit_bytes=vmem_limit,
        ),
        cost_estimate=cost,
    )(xr, wg, sel, b2)

    # Already NCHW: (N, C_out, Ho, Wo).
    return out


def reference_downconv(x, weight, bias, stride=2):
    """Pure-JAX reference: conv2d(stride=kernel=stride, padding=0) + ReLU."""
    y = lax.conv_general_dilated(
        x, weight, window_strides=(stride, stride), padding="VALID",
        dimension_numbers=("NCHW", "OIHW", "NCHW"))
    y = y + bias.reshape(1, -1, 1, 1)
    return jnp.maximum(y, 0.0)


if __name__ == "__main__":
    key = jax.random.PRNGKey(0)
    kx, kw_, kb = jax.random.split(key, 3)

    # Small shapes consistent with the module: batch=2, C_in=4, C_out=8, spatial=16, stride=2.
    N, C_in, C_out, H, W, stride = 2, 4, 8, 16, 16, 2

    x = jax.random.normal(kx, (N, C_in, H, W), dtype=jnp.float32)
    weight = jax.random.normal(kw_, (C_out, C_in, stride, stride), dtype=jnp.float32) * 0.1
    bias = jax.random.normal(kb, (C_out,), dtype=jnp.float32) * 0.1

    out = jax.block_until_ready(downconv(x, weight, bias, stride=stride))

    # Reference on bf16-rounded inputs (kernel uses bf16 matmuls with f32 accumulation).
    xr_ = x.astype(jnp.bfloat16).astype(jnp.float32)
    wr_ = weight.astype(jnp.bfloat16).astype(jnp.float32)
    ref = jax.block_until_ready(reference_downconv(xr_, wr_, bias, stride=stride))

    assert out.shape == (N, C_out, H // stride, W // stride)
    assert out.dtype == x.dtype
    assert jnp.allclose(out, ref, atol=1e-3, rtol=1e-3), float(jnp.max(jnp.abs(out - ref)))

    print("KERNEL_OK")
</pallas_src>

<mosaic_0001>
module attributes {stable_mosaic.version = 11 : i64} {
  func.func @_downconv_kernel(%arg0: i32, %arg1: i32, %arg2: memref<1x4x8x32xf32, #tpu.memory_space<vmem>>, %arg3: memref<4x8x4xbf16, #tpu.memory_space<vmem>>, %arg4: memref<15x8xbf16, #tpu.memory_space<vmem>>, %arg5: memref<8x1xf32, #tpu.memory_space<vmem>>, %arg6: memref<1x8x8x8xf32, #tpu.memory_space<vmem>>) attributes {dimension_semantics = [#tpu.dimension_semantics<parallel>, #tpu.dimension_semantics<parallel>], iteration_bounds = array<i64: 2, 1>, scalar_prefetch = 0 : i64, scratch_operands = 0 : i64, tpu.core_type = #tpu.core_type<tc>, window_params = [{transform_indices = @transform_0, window_bounds = array<i64: 1, 4, 8, 32>}, {pipeline_mode = #tpu.pipeline_mode<synchronous>, transform_indices = @transform_1, window_bounds = array<i64: 4, 8, 4>}, {pipeline_mode = #tpu.pipeline_mode<synchronous>, transform_indices = @transform_2, window_bounds = array<i64: 15, 8>}, {pipeline_mode = #tpu.pipeline_mode<synchronous>, transform_indices = @transform_3, window_bounds = array<i64: 8, 1>}, {transform_indices = @transform_4, window_bounds = array<i64: 1, 8, 8, 8>}]} {
    %c0 = arith.constant 0 : index
    %c0_0 = arith.constant 0 : index
    %0 = vector.load %arg4[%c0, %c0_0] : memref<15x8xbf16, #tpu.memory_space<vmem>>, vector<15x8xbf16>
    %c0_1 = arith.constant 0 : index
    %c0_2 = arith.constant 0 : index
    %1 = vector.load %arg5[%c0_1, %c0_2] : memref<8x1xf32, #tpu.memory_space<vmem>>, vector<8x1xf32>
    %c0_i32 = arith.constant 0 : i32
    %c8_i32 = arith.constant 8 : i32
    %2 = arith.addi %c0_i32, %c8_i32 : i32
    %c1_i32 = arith.constant 1 : i32
    scf.for %arg7 = %c0_i32 to %2 step %c1_i32  : i32 {
      %c0_4 = arith.constant 0 : index
      %c0_5 = arith.constant 0 : index
      %3 = arith.index_cast %arg7 : i32 to index
      %c0_6 = arith.constant 0 : index
      %4 = vector.load %arg2[%c0_4, %c0_5, %3, %c0_6] : memref<1x4x8x32xf32, #tpu.memory_space<vmem>>, vector<1x4x1x32xf32>
      %5 = vector.shape_cast %4 : vector<1x4x1x32xf32> to vector<4x32xf32>
      %6 = arith.truncf %5 : vector<4x32xf32> to vector<4x32xbf16>
      %cst = arith.constant 0.000000e+00 : f32
      %7 = vector.broadcast %cst : f32 to vector<8x8xf32>
      %8 = vector.extract_strided_slice %6 {offsets = [0, 0], sizes = [4, 15], strides = [1, 1]} : vector<4x32xbf16> to vector<4x15xbf16>
      %cst_7 = arith.constant dense<0.000000e+00> : vector<4x8xf32>
      %9 = tpu.matmul %8, %0, %cst_7 {dimension_numbers = #tpu.dot_dimension_numbers<[1], [0], [0], [1], [0, 0, 1, 1], [], []>} : vector<4x15xbf16>, vector<15x8xbf16>, vector<4x8xf32> -> vector<4x8xf32>
      %10 = arith.truncf %9 : vector<4x8xf32> to vector<4x8xbf16>
      %c0_8 = arith.constant 0 : index
      %c0_9 = arith.constant 0 : index
      %c0_10 = arith.constant 0 : index
      %11 = vector.load %arg3[%c0_8, %c0_9, %c0_10] : memref<4x8x4xbf16, #tpu.memory_space<vmem>>, vector<1x8x4xbf16>
      %12 = vector.shape_cast %11 : vector<1x8x4xbf16> to vector<8x4xbf16>
      %cst_11 = arith.constant dense<0.000000e+00> : vector<8x8xf32>
      %13 = tpu.matmul %12, %10, %cst_11 {dimension_numbers = #tpu.dot_dimension_numbers<[1], [0], [0], [1], [0, 0, 1, 1], [], []>} : vector<8x4xbf16>, vector<4x8xbf16>, vector<8x8xf32> -> vector<8x8xf32>
      %14 = arith.addf %7, %13 : vector<8x8xf32>
      %15 = vector.extract_strided_slice %6 {offsets = [0, 1], sizes = [4, 15], strides = [1, 1]} : vector<4x32xbf16> to vector<4x15xbf16>
      %cst_12 = arith.constant dense<0.000000e+00> : vector<4x8xf32>
      %16 = tpu.matmul %15, %0, %cst_12 {dimension_numbers = #tpu.dot_dimension_numbers<[1], [0], [0], [1], [0, 0, 1, 1], [], []>} : vector<4x15xbf16>, vector<15x8xbf16>, vector<4x8xf32> -> vector<4x8xf32>
      %17 = arith.truncf %16 : vector<4x8xf32> to vector<4x8xbf16>
      %c1 = arith.constant 1 : index
      %c0_13 = arith.constant 0 : index
      %c0_14 = arith.constant 0 : index
      %18 = vector.load %arg3[%c1, %c0_13, %c0_14] : memref<4x8x4xbf16, #tpu.memory_space<vmem>>, vector<1x8x4xbf16>
      %19 = vector.shape_cast %18 : vector<1x8x4xbf16> to vector<8x4xbf16>
      %cst_15 = arith.constant dense<0.000000e+00> : vector<8x8xf32>
      %20 = tpu.matmul %19, %17, %cst_15 {dimension_numbers = #tpu.dot_dimension_numbers<[1], [0], [0], [1], [0, 0, 1, 1], [], []>} : vector<8x4xbf16>, vector<4x8xbf16>, vector<8x8xf32> -> vector<8x8xf32>
      %21 = arith.addf %14, %20 : vector<8x8xf32>
      %22 = vector.extract_strided_slice %6 {offsets = [0, 16], sizes = [4, 15], strides = [1, 1]} : vector<4x32xbf16> to vector<4x15xbf16>
      %cst_16 = arith.constant dense<0.000000e+00> : vector<4x8xf32>
      %23 = tpu.matmul %22, %0, %cst_16 {dimension_numbers = #tpu.dot_dimension_numbers<[1], [0], [0], [1], [0, 0, 1, 1], [], []>} : vector<4x15xbf16>, vector<15x8xbf16>, vector<4x8xf32> -> vector<4x8xf32>
      %24 = arith.truncf %23 : vector<4x8xf32> to vector<4x8xbf16>
      %c2 = arith.constant 2 : index
      %c0_17 = arith.constant 0 : index
      %c0_18 = arith.constant 0 : index
      %25 = vector.load %arg3[%c2, %c0_17, %c0_18] : memref<4x8x4xbf16, #tpu.memory_space<vmem>>, vector<1x8x4xbf16>
      %26 = vector.shape_cast %25 : vector<1x8x4xbf16> to vector<8x4xbf16>
      %cst_19 = arith.constant dense<0.000000e+00> : vector<8x8xf32>
      %27 = tpu.matmul %26, %24, %cst_19 {dimension_numbers = #tpu.dot_dimension_numbers<[1], [0], [0], [1], [0, 0, 1, 1], [], []>} : vector<8x4xbf16>, vector<4x8xbf16>, vector<8x8xf32> -> vector<8x8xf32>
      %28 = arith.addf %21, %27 : vector<8x8xf32>
      %29 = vector.extract_strided_slice %6 {offsets = [0, 17], sizes = [4, 15], strides = [1, 1]} : vector<4x32xbf16> to vector<4x15xbf16>
      %cst_20 = arith.constant dense<0.000000e+00> : vector<4x8xf32>
      %30 = tpu.matmul %29, %0, %cst_20 {dimension_numbers = #tpu.dot_dimension_numbers<[1], [0], [0], [1], [0, 0, 1, 1], [], []>} : vector<4x15xbf16>, vector<15x8xbf16>, vector<4x8xf32> -> vector<4x8xf32>
      %31 = arith.truncf %30 : vector<4x8xf32> to vector<4x8xbf16>
      %c3 = arith.constant 3 : index
      %c0_21 = arith.constant 0 : index
      %c0_22 = arith.constant 0 : index
      %32 = vector.load %arg3[%c3, %c0_21, %c0_22] : memref<4x8x4xbf16, #tpu.memory_space<vmem>>, vector<1x8x4xbf16>
      %33 = vector.shape_cast %32 : vector<1x8x4xbf16> to vector<8x4xbf16>
      %cst_23 = arith.constant dense<0.000000e+00> : vector<8x8xf32>
      %34 = tpu.matmul %33, %31, %cst_23 {dimension_numbers = #tpu.dot_dimension_numbers<[1], [0], [0], [1], [0, 0, 1, 1], [], []>} : vector<8x4xbf16>, vector<4x8xbf16>, vector<8x8xf32> -> vector<8x8xf32>
      %35 = arith.addf %28, %34 : vector<8x8xf32>
      %36 = vector.broadcast %1 : vector<8x1xf32> to vector<8x8xf32>
      %37 = arith.addf %35, %36 : vector<8x8xf32>
      %cst_24 = arith.constant 0.000000e+00 : f32
      %38 = vector.broadcast %cst_24 : f32 to vector<8x8xf32>
      %39 = arith.maximumf %37, %38 : vector<8x8xf32>
      %c0_25 = arith.constant 0 : index
      %c0_26 = arith.constant 0 : index
      %40 = arith.index_cast %arg7 : i32 to index
      %c0_27 = arith.constant 0 : index
      %41 = vector.load %arg6[%c0_25, %c0_26, %40, %c0_27] : memref<1x8x8x8xf32, #tpu.memory_space<vmem>>, vector<1x8x1x8xf32>
      %42 = vector.shape_cast %41 : vector<1x8x1x8xf32> to vector<8x8xf32>
      %43 = vector.shape_cast %39 : vector<8x8xf32> to vector<1x8x1x8xf32>
      tpu.vector_store %arg6[%c0_25, %c0_26, %40, %c0_27], %43 {strides = array<i32>} : memref<1x8x8x8xf32, #tpu.memory_space<vmem>>, vector<1x8x1x8xf32>,
    }
    %c8_i32_3 = arith.constant 8 : i32
    return
  }
  func.func @transform_0(%arg0: i32, %arg1: i32) -> (i32, i32, i32, i32) {
    %c0_i32 = arith.constant 0 : i32
    %c0_i32_0 = arith.constant 0 : i32
    %c0_i32_1 = arith.constant 0 : i32
    return %arg0, %c0_i32, %arg1, %c0_i32_0 : i32, i32, i32, i32
  }
  func.func @transform_1(%arg0: i32, %arg1: i32) -> (i32, i32, i32) {
    %c0_i32 = arith.constant 0 : i32
    %c0_i32_0 = arith.constant 0 : i32
    %c0_i32_1 = arith.constant 0 : i32
    %c0_i32_2 = arith.constant 0 : i32
    return %c0_i32, %c0_i32_0, %c0_i32_1 : i32, i32, i32
  }
  func.func @transform_2(%arg0: i32, %arg1: i32) -> (i32, i32) {
    %c0_i32 = arith.constant 0 : i32
    %c0_i32_0 = arith.constant 0 : i32
    %c0_i32_1 = arith.constant 0 : i32
    return %c0_i32, %c0_i32_0 : i32, i32
  }
  func.func @transform_3(%arg0: i32, %arg1: i32) -> (i32, i32) {
    %c0_i32 = arith.constant 0 : i32
    %c0_i32_0 = arith.constant 0 : i32
    %c0_i32_1 = arith.constant 0 : i32
    return %c0_i32, %c0_i32_0 : i32, i32
  }
  func.func @transform_4(%arg0: i32, %arg1: i32) -> (i32, i32, i32, i32) {
    %c0_i32 = arith.constant 0 : i32
    %c0_i32_0 = arith.constant 0 : i32
    %c0_i32_1 = arith.constant 0 : i32
    return %arg0, %c0_i32, %arg1, %c0_i32_0 : i32, i32, i32, i32
  }
}

</mosaic_0001>

<llo_original>
// kernel: downconv.1
$region0: #{downconv.1}
  #allocation0 [shape = 'u32[]', space=smem, size = 0x4, offset = 0x4, fixed_abs, tag = 'smem constant byte address 0x4 - core index']
  #allocation1 [shape = 'u32[144,128]{1,0:T(1,128)}', space=vmem, size = 0x12000, scoped, tag = 'internal scratch']
  %s0 = inlined_call_operand.vmem [shape: f32[2,4,8,32], index: 0, kind: input, shape index: {}]
  %s1 = inlined_call_operand.vmem [shape: bf16[4,8,4], index: 1, kind: input, shape index: {}]
  %s2 = inlined_call_operand.vmem [shape: bf16[15,8], index: 2, kind: input, shape index: {}]
  %s3 = inlined_call_operand.vmem [shape: f32[8,1], index: 3, kind: input, shape index: {}]
  %s4 = inlined_call_operand.hbm [shape: f32[2,8,8,8], index: 4, kind: output, shape index: {}]
  %s5 = sld [smem:[#allocation0]]
  $region56: #{downconv.1} parent=0
    _
  %s7 = ssub.s32 1, %s5
  %s8 = scalar_select 0, %s7, %s5
  $region1: #{downconv.1} parent=0
    #allocation2 [shape = 'u8[65536]{0}', space=vmem, size = 0x10000, scoped, tag = 'output window, operand 0']
    #allocation3 [shape = 's32[2]{0}', space=sflag, size = 0x8, scoped, tag = 'scoped memory for downconv.1']
    %9 = vsyncpa [#allocation3], 0
    %s10 = scalar_lea.sflag [#allocation3], 1
    %11 = vsyncpa %s10, 0
    loop: start=0, step=1, limit=4
    $region2: #{downconv.1} parent=1 // loop_pre_header
      _
    $region3: #{downconv.1} parent=1 // loop_header
      %s13 = sphi 0, %s17
      %p14 = scmp.ge.s32.totalorder %s13, 4
      %s20 = sphi 0, %s32
      %s21 = sphi 0, %s28
      %s22 = sphi 0, %s20
      %s23 = sphi 0, %s21
      %s24 = sphi 0, %s22
      %s25 = sphi 0, %s23
      %s37 = sphi 0, %s39
      %s40 = sphi 0, %s37
      %s41 = sphi 0, %s40
      %s57 = sphi 0, %s41
      %s61 = sphi 0, %s61
      %s63 = sphi 0, %s61
      %s64 = sphi 0, %s63
      %s78 = sphi 0, %s64
      %s82 = sphi 0, %s82
      %s84 = sphi 0, %s82
      %s85 = sphi 0, %s84
      %s99 = sphi 0, %s85
      %s103 = sphi 0, %s103
      %s105 = sphi 0, %s103
      %s106 = sphi 0, %s105
      %s120 = sphi 0, %s106
      %s128 = sphi 0, %s130
      %s131 = sphi 0, %s128
      %s132 = sphi 0, %s131
      %s148 = sphi 0, %s132
    $region4: #{downconv.1} parent=1 // loop_header_branch
      %16 = sbr.rel (%p14) target = $region8
    $region5: #{downconv.1} parent=1 // loop_body
      %s18 = ssub.s32 %s13, 1
      %s19 = ssub.s32 %s13, 2
      %s26 = sadd.s32 1, %s21
      %p27 = scmp.ge.s32.totalorder %s26, 1
      %s28 = scalar_select %p27, 0, %s26
      %s29 = sadd.s32 1, %s20
      %s30 = scalar_select %p27, %s29, %s20
      %p31 = scmp.ge.s32.totalorder %s30, 2
      %s32 = scalar_select %p31, 0, %s30
      %s33 = ssub.s32 %s20, %s32
      %s34 = ssub.s32 %s21, %s28
      %s35 = sor.u32 %s33, %s34
      %p36 = scmp.eq.s32.totalorder %s35, 0
      %s38 = sadd.s32 %s37, 1
      %s39 = scalar_select %p36, %s37, %s38
      %p42 = pneg %p36
      %p43 = scmp.eq.s32.totalorder %s13, 1
      %p44 = por %p42, %p43
      %p45 = scmp.ne.s32.totalorder %s37, %s40
      %p46 = scmp.eq.s32.totalorder %s13, 0
      %p47 = por %p45, %p46
      %p48 = scmp.ne.s32.totalorder %s37, %s40
      %p49 = scmp.eq.s32.totalorder %s18, 1
      %p50 = por %p48, %p49
      %p51 = scmp.ne.s32.totalorder %s40, %s41
      %p52 = scmp.eq.s32.totalorder %s18, 0
      %p53 = por %p51, %p52
      %p54 = scmp.ne.s32.totalorder %s40, %s41
      %p55 = scmp.eq.s32.totalorder %s19, 1
      %p56 = por %p54, %p55
      %p58 = scmp.ne.s32.totalorder %s41, %s57
      %p59 = scmp.eq.s32.totalorder %s19, 0
      %p60 = por %p58, %p59
      %s62 = sadd.s32 %s61, 1
      %p65 = scmp.eq.s32.totalorder %s13, 1
      %p66 = scmp.ne.s32.totalorder %s61, %s63
      %p67 = scmp.eq.s32.totalorder %s13, 0
      %p68 = por %p66, %p67
      %p69 = scmp.ne.s32.totalorder %s61, %s63
      %p70 = scmp.eq.s32.totalorder %s18, 1
      %p71 = por %p69, %p70
      %p72 = scmp.ne.s32.totalorder %s63, %s64
      %p73 = scmp.eq.s32.totalorder %s18, 0
      %p74 = por %p72, %p73
      %p75 = scmp.ne.s32.totalorder %s63, %s64
      %p76 = scmp.eq.s32.totalorder %s19, 1
      %p77 = por %p75, %p76
      %p79 = scmp.ne.s32.totalorder %s64, %s78
      %p80 = scmp.eq.s32.totalorder %s19, 0
      %p81 = por %p79, %p80
      %s83 = sadd.s32 %s82, 1
      %p86 = scmp.eq.s32.totalorder %s13, 1
      %p87 = scmp.ne.s32.totalorder %s82, %s84
      %p88 = scmp.eq.s32.totalorder %s13, 0
      %p89 = por %p87, %p88
      %p90 = scmp.ne.s32.totalorder %s82, %s84
      %p91 = scmp.eq.s32.totalorder %s18, 1
      %p92 = por %p90, %p91
      %p93 = scmp.ne.s32.totalorder %s84, %s85
      %p94 = scmp.eq.s32.totalorder %s18, 0
      %p95 = por %p93, %p94
      %p96 = scmp.ne.s32.totalorder %s84, %s85
      %p97 = scmp.eq.s32.totalorder %s19, 1
      %p98 = por %p96, %p97
      %p100 = scmp.ne.s32.totalorder %s85, %s99
      %p101 = scmp.eq.s32.totalorder %s19, 0
      %p102 = por %p100, %p101
      %s104 = sadd.s32 %s103, 1
      %p107 = scmp.eq.s32.totalorder %s13, 1
      %p108 = scmp.ne.s32.totalorder %s103, %s105
      %p109 = scmp.eq.s32.totalorder %s13, 0
      %p110 = por %p108, %p109
      %p111 = scmp.ne.s32.totalorder %s103, %s105
      %p112 = scmp.eq.s32.totalorder %s18, 1
      %p113 = por %p111, %p112
      %p114 = scmp.ne.s32.totalorder %s105, %s106
      %p115 = scmp.eq.s32.totalorder %s18, 0
      %p116 = por %p114, %p115
      %p117 = scmp.ne.s32.totalorder %s105, %s106
      %p118 = scmp.eq.s32.totalorder %s19, 1
      %p119 = por %p117, %p118
      %p121 = scmp.ne.s32.totalorder %s106, %s120
      %p122 = scmp.eq.s32.totalorder %s19, 0
      %p123 = por %p121, %p122
      %s124 = ssub.s32 %s20, %s32
      %s125 = ssub.s32 %s21, %s28
      %s126 = sor.u32 %s124, %s125
      %p127 = scmp.eq.s32.totalorder %s126, 0
      %s129 = sadd.s32 %s128, 1
      %s130 = scalar_select %p127, %s128, %s129
      %p133 = pneg %p127
      %p134 = scmp.eq.s32.totalorder %s13, 1
      %p135 = por %p133, %p134
      %p136 = scmp.ne.s32.totalorder %s128, %s131
      %p137 = scmp.eq.s32.totalorder %s13, 0
      %p138 = por %p136, %p137
      %p139 = scmp.ne.s32.totalorder %s128, %s131
      %p140 = scmp.eq.s32.totalorder %s18, 1
      %p141 = por %p139, %p140
      %p142 = scmp.ne.s32.totalorder %s131, %s132
      %p143 = scmp.eq.s32.totalorder %s18, 0
      %p144 = por %p142, %p143
      %p145 = scmp.ne.s32.totalorder %s131, %s132
      %p146 = scmp.eq.s32.totalorder %s19, 1
      %p147 = por %p145, %p146
      %p149 = scmp.ne.s32.totalorder %s132, %s148
      %p150 = scmp.eq.s32.totalorder %s19, 0
      %p151 = por %p149, %p150
      %p152 = scmp.le.s32.totalorder 1, %s13
      %p153 = scmp.lt.s32.totalorder %s13, 3
      %p154 = pnand %p152, %p153
      %p155 = pneg %p154
      // Predicated region
      $region9: #{downconv.1} parent=5 // pred_check
        _
      $region10: #{downconv.1} parent=5 // pred_check_branch
        %157 = sbr.rel (%p154) target = $region12
      $region11: #{downconv.1} parent=5 // pred_region
        %s158 = ssub.s32 %s13, 1
        // Predicated region
        $region13: #{downconv.1} parent=11 // pred_check
          %p159 = pneg %p74
        $region14: #{downconv.1} parent=11 // pred_check_branch
          %161 = sbr.rel (%p159) target = $region16
        $region15: #{downconv.1} parent=11 // pred_region
          _
        $region16: #{downconv.1} parent=11 // pred_fallthru
          _
        // Predicated region
        $region17: #{downconv.1} parent=11 // pred_check
          %p162 = pneg %p95
        $region18: #{downconv.1} parent=11 // pred_check_branch
          %164 = sbr.rel (%p162) target = $region20
        $region19: #{downconv.1} parent=11 // pred_region
          _
        $region20: #{downconv.1} parent=11 // pred_fallthru
          _
        // Predicated region
        $region21: #{downconv.1} parent=11 // pred_check
          %p165 = pneg %p116
        $region22: #{downconv.1} parent=11 // pred_check_branch
          %167 = sbr.rel (%p165) target = $region24
        $region23: #{downconv.1} parent=11 // pred_region
          _
        $region24: #{downconv.1} parent=11 // pred_fallthru
          _
      $region12: #{downconv.1} parent=5 // pred_fallthru
        _
      %p168 = scmp.lt.s32.totalorder %s13, 2
      // Predicated region
      $region25: #{downconv.1} parent=5 // pred_check
        %p169 = pneg %p168
      $region26: #{downconv.1} parent=5 // pred_check_branch
        %171 = sbr.rel (%p169) target = $region28
      $region27: #{downconv.1} parent=5 // pred_region
        // Predicated region
        $region29: #{downconv.1} parent=27 // pred_check
          %p172 = pneg %p47
        $region30: #{downconv.1} parent=27 // pred_check_branch
          %174 = sbr.rel (%p172) target = $region32
        $region31: #{downconv.1} parent=27 // pred_region
          %p175 = scmp.lt.s32.totalorder %s20, 1
          %s176 = scalar_select %p175, %s20, 1
          %p177 = scmp.lt.s32.totalorder %s21, 0
          %s178 = scalar_select %p177, %s21, 0
          %s179 = smul.addr %s176, 4
          %s180 = sadd.s32 %s178, %s179
          %s181 = smul.addr %s180, 8
          %s182 = scalar_lea.vmem %s0, %s181
        $region32: #{downconv.1} parent=27 // pred_fallthru
          _
      $region28: #{downconv.1} parent=5 // pred_fallthru
        _
      %p183 = scmp.le.s32.totalorder 1, %s13
      %p184 = scmp.lt.s32.totalorder %s13, 3
      %p185 = pnand %p183, %p184
      %p186 = pneg %p185
      // Predicated region
      $region33: #{downconv.1} parent=5 // pred_check
        _
      $region34: #{downconv.1} parent=5 // pred_check_branch
        %188 = sbr.rel (%p185) target = $region36
      $region35: #{downconv.1} parent=5 // pred_region
        %s189 = ssub.s32 %s13, 1
        %p190 = scmp.lt.s32.totalorder %s22, 1
        %s191 = scalar_select %p190, %s22, 1
        %p192 = scmp.lt.s32.totalorder %s23, 0
        %s193 = scalar_select %p192, %s23, 0
        %s194 = smul.addr %s191, 4
        %s195 = sadd.s32 %s193, %s194
        %s196 = smul.addr %s195, 8
        %s197 = scalar_lea.vmem %s0, %s196
        %p198 = pneg %p53
        %p199 = pneg %p50
        %p200 = pneg %p74
        %p201 = pneg %p71
        %p202 = pneg %p95
        %p203 = pneg %p92
        %p204 = pneg %p116
        %p205 = pneg %p113
        %p206 = pneg %p144
        %p207 = pneg %p141
        %s208 = sand.u32 %s131, 1
        %s209 = scalar_lea.sflag [#allocation3], %s208
        %s210 = sand.u32 %s131, 1
        %s211 = smul.addr %s210, 64
        %s212 = scalar_lea.vmem [#allocation2], %s211
        %p213 = scmp.lt.s32.totalorder %s22, 1
        %s214 = scalar_select %p213, %s22, 1
        %p215 = scmp.lt.s32.totalorder %s23, 0
        %s216 = scalar_select %p215, %s23, 0
        %s217 = smul.addr %s214, 4
        %s218 = sadd.s32 %s216, %s217
        %s219 = smul.addr %s218, 8
        %s220 = scalar_lea.vmem %s0, %s219
        %v222 = vld [vmem:[%s2] sm:$0xf]
        %v223 = vld [vmem:[%s2 + $0x4] sm:$0xf]
        %v224 = vld [vmem:[%s3] sm:$0xff]
        loop: start=0, step=1, limit=8
        $region37: #{downconv.1} parent=35 // loop_pre_header
          _
        $region38: #{downconv.1} parent=35 // loop_header
          %s226 = sphi 0, %s230
          %p227 = scmp.ge.s32.totalorder %s226, 8
        $region39: #{downconv.1} parent=35 // loop_header_branch
          %229 = sbr.rel (%p227) target = $region43
        $region40: #{downconv.1} parent=35 // loop_body
          %s231 = scalar_lea.vmem %s220, %s226
          %v232 = vld [vmem:[%s231] sm:$0x1]
          %v233 = vld [vmem:[%s231 + $0x8] sm:$0x1]
          %v234 = vld [vmem:[%s231 + $0x10] sm:$0x1]
          %v235 = vld [vmem:[%s231 + $0x18] sm:$0x1]
          %v236 = vpack.c.bf16 %v232, %v232
          %v237 = vpack.c.bf16 %v233, %v233
          %v238 = vpack.c.bf16 %v234, %v234
          %v239 = vpack.c.bf16 %v235, %v235
          %v244 = vunpack.c.l.b16 %v236
          %v245 = vunpack.c.l.b16 %v237
          %v246 = vunpack.c.l.b16 %v238
          %v247 = vunpack.c.l.b16 %v239
          %v248 = vrot.slane %v245, 7
          %vm249 = vcmask 1041409
          %v250 = vsel %vm249, %v248, %v244
          %v251 = vrot.slane %v246, 6
          %vm252 = vcmask 1042434
          %v253 = vsel %vm252, %v251, %v250
          %v254 = vrot.slane %v247, 5
          %vm255 = vcmask 1043459
          %v256 = vsel %vm255, %v254, %v253
          %v257 = vpack.c.b16 %v256, %v256
          %v260 = vunpack.c.l.b16 %v222
          %v261 = vunpack.c.l.b16 %v223
          %v262 = vpack.c.b16 %v261, %v260
          %vm263 = vcmask 121856
          %v265 = vsel %vm263, %v257, 0
          %vm267 = vcmask 1046528
          %vm268 = vcmask 1047552
          %v269 = vsel %vm267, 4294967295, 65535
          %v270 = vsel %vm268, %v269, 0
          %v272 = vand.u32 %v262, %v270
          %274 = vmatprep.subr.bf16.mxu0 0
          %275 = vmatpush1.bf16.msra.mxu0 0
          %276 = vmatprep.subr.bf16.mxu0 0
          %277 = vmatpush1.bf16.msra.mxu0 0
          %278 = vmatprep.subr.bf16.mxu0 0
          %279 = vmatpush1.bf16.msra.mxu0 0
          %280 = vmatprep.subr.bf16.mxu0 0
          %281 = vmatpush1.bf16.msra.mxu0 0
          %282 = vmatprep.subr.bf16.mxu0 0
          %283 = vmatpush1.bf16.msra.mxu0 0
          %284 = vmatprep.subr.bf16.mxu0 0
          %285 = vmatpush1.bf16.msra.mxu0 0
          %286 = vmatprep.subr.bf16.mxu0 0
          %287 = vmatpush1.bf16.msra.mxu0 0
          %288 = vmatprep.subr.bf16.mxu0 0
          %289 = vmatpush1.bf16.msra.mxu0 %v272
          %290 = vmatprep.subr.bf16.mxu0 0
          %291 = vmatpush2.bf16.msra.mxu0 0
          %292 = vmatprep.subr.bf16.mxu0 0
          %293 = vmatpush2.bf16.msra.mxu0 0
          %294 = vmatprep.subr.bf16.mxu0 0
          %295 = vmatpush2.bf16.msra.mxu0 0
          %296 = vmatprep.subr.bf16.mxu0 0
          %297 = vmatpush2.bf16.msra.mxu0 0
          %298 = vmatprep.subr.bf16.mxu0 0
          %299 = vmatpush2.bf16.msra.mxu0 0
          %300 = vmatprep.subr.bf16.mxu0 0
          %301 = vmatpush2.bf16.msra.mxu0 0
          %302 = vmatprep.subr.bf16.mxu0 0
          %303 = vmatpush2.bf16.msra.mxu0 0
          %304 = vmatprep.subr.bf16.mxu0 0
          %305 = vmatpush2.bf16.msra.mxu0 0
          %306 = vmatprep.mubr.bf16.mxu0 0
          %307 = vmatmul.mubr.bf16.gmra.mxu0 %v265
          %v308 = vpop.f32.mrf.mxu0
          %v309 = vadd.f32 0.0, %v308
          %v310 = vpop.f32.mrf.mxu0
          %v311 = vpop.f32.mrf.mxu0
          %v312 = vpop.f32.mrf.mxu0
          %313 = vdwg.mxu0
          %v314 = vpack.c.bf16 %v309, %v309
          %v315 = vld [vmem:[%s1] sm:$0xf]
          %316 = vrot.lane.b32.xlu0 %v257, 127
          %v317 = vpop.permute.xlu0 %316
          %v319 = vsel %vm263, %v317, 0
          %321 = vmatprep.subr.bf16.mxu0 0
          %322 = vmatpush1.bf16.msra.mxu0 0
          %323 = vmatprep.subr.bf16.mxu0 0
          %324 = vmatpush1.bf16.msra.mxu0 0
          %325 = vmatprep.subr.bf16.mxu0 0
          %326 = vmatpush1.bf16.msra.mxu0 0
          %327 = vmatprep.subr.bf16.mxu0 0
          %328 = vmatpush1.bf16.msra.mxu0 0
          %329 = vmatprep.subr.bf16.mxu0 0
          %330 = vmatpush1.bf16.msra.mxu0 0
          %331 = vmatprep.subr.bf16.mxu0 0
          %332 = vmatpush1.bf16.msra.mxu0 0
          %333 = vmatprep.subr.bf16.mxu0 0
          %334 = vmatpush1.bf16.msra.mxu0 0
          %335 = vmatprep.subr.bf16.mxu0 0
          %336 = vmatpush1.bf16.msra.mxu0 %v272
          %337 = vmatprep.subr.bf16.mxu0 0
          %338 = vmatpush2.bf16.msra.mxu0 0
          %339 = vmatprep.subr.bf16.mxu0 0
          %340 = vmatpush2.bf16.msra.mxu0 0
          %341 = vmatprep.subr.bf16.mxu0 0
          %342 = vmatpush2.bf16.msra.mxu0 0
          %343 = vmatprep.subr.bf16.mxu0 0
          %344 = vmatpush2.bf16.msra.mxu0 0
          %345 = vmatprep.subr.bf16.mxu0 0
          %346 = vmatpush2.bf16.msra.mxu0 0
          %347 = vmatprep.subr.bf16.mxu0 0
          %348 = vmatpush2.bf16.msra.mxu0 0
          %349 = vmatprep.subr.bf16.mxu0 0
          %350 = vmatpush2.bf16.msra.mxu0 0
          %351 = vmatprep.subr.bf16.mxu0 0
          %352 = vmatpush2.bf16.msra.mxu0 0
          %353 = vmatprep.mubr.bf16.mxu0 0
          %354 = vmatmul.mubr.bf16.gmra.mxu0 %v319
          %v355 = vpop.f32.mrf.mxu0
          %v356 = vadd.f32 0.0, %v355
          %v357 = vpop.f32.mrf.mxu0
          %v358 = vpop.f32.mrf.mxu0
          %v359 = vpop.f32.mrf.mxu0
          %360 = vdwg.mxu0
          %v361 = vpack.c.bf16 %v356, %v356
          %s362 = scalar_lea.vmem %s1, 4
          %v363 = vld [vmem:[%s362] sm:$0xf]
          %vm364 = vcmask 31744
          %v366 = vsel %vm364, %v363, 0
          %vm368 = vcmask 1041408
          %v370 = vsel %vm368, %v361, 0
          %372 = vmatprep.subr.bf16.mxu0 0
          %373 = vmatpush1.bf16.msra.mxu0 0
          %374 = vmatprep.subr.bf16.mxu0 0
          %375 = vmatpush1.bf16.msra.mxu0 0
          %376 = vmatprep.subr.bf16.mxu0 0
          %377 = vmatpush1.bf16.msra.mxu0 0
          %378 = vmatprep.subr.bf16.mxu0 0
          %379 = vmatpush1.bf16.msra.mxu0 0
          %380 = vmatprep.subr.bf16.mxu0 0
          %381 = vmatpush1.bf16.msra.mxu0 0
          %382 = vmatprep.subr.bf16.mxu0 0
          %383 = vmatpush1.bf16.msra.mxu0 0
          %384 = vmatprep.subr.bf16.mxu0 0
          %385 = vmatpush1.bf16.msra.mxu0 0
          %386 = vmatprep.subr.bf16.mxu0 0
          %387 = vmatpush1.bf16.msra.mxu0 %v370
          %388 = vmatprep.subr.bf16.mxu0 0
          %389 = vmatpush2.bf16.msra.mxu0 0
          %390 = vmatprep.subr.bf16.mxu0 0
          %391 = vmatpush2.bf16.msra.mxu0 0
          %392 = vmatprep.subr.bf16.mxu0 0
          %393 = vmatpush2.bf16.msra.mxu0 0
          %394 = vmatprep.subr.bf16.mxu0 0
          %395 = vmatpush2.bf16.msra.mxu0 0
          %396 = vmatprep.subr.bf16.mxu0 0
          %397 = vmatpush2.bf16.msra.mxu0 0
          %398 = vmatprep.subr.bf16.mxu0 0
          %399 = vmatpush2.bf16.msra.mxu0 0
          %400 = vmatprep.subr.bf16.mxu0 0
          %401 = vmatpush2.bf16.msra.mxu0 0
          %402 = vmatprep.subr.bf16.mxu0 0
          %403 = vmatpush2.bf16.msra.mxu0 0
          %404 = vmatprep.mubr.bf16.mxu0 0
          %405 = vmatmul.mubr.bf16.gmra.mxu0 %v366
          %v406 = vpop.f32.mrf.mxu0
          %v407 = vadd.f32 0.0, %v406
          %v408 = vpop.f32.mrf.mxu0
          %v409 = vpop.f32.mrf.mxu0
          %v410 = vpop.f32.mrf.mxu0
          %411 = vdwg.mxu0
          %v413 = vsel %vm364, %v315, 0
          %v416 = vsel %vm368, %v314, 0
          %418 = vmatprep.subr.bf16.mxu0 0
          %419 = vmatpush1.bf16.msra.mxu0 0
          %420 = vmatprep.subr.bf16.mxu0 0
          %421 = vmatpush1.bf16.msra.mxu0 0
          %422 = vmatprep.subr.bf16.mxu0 0
          %423 = vmatpush1.bf16.msra.mxu0 0
          %424 = vmatprep.subr.bf16.mxu0 0
          %425 = vmatpush1.bf16.msra.mxu0 0
          %426 = vmatprep.subr.bf16.mxu0 0
          %427 = vmatpush1.bf16.msra.mxu0 0
          %428 = vmatprep.subr.bf16.mxu0 0
          %429 = vmatpush1.bf16.msra.mxu0 0
          %430 = vmatprep.subr.bf16.mxu0 0
          %431 = vmatpush1.bf16.msra.mxu0 0
          %432 = vmatprep.subr.bf16.mxu0 0
          %433 = vmatpush1.bf16.msra.mxu0 %v416
          %434 = vmatprep.subr.bf16.mxu0 0
          %435 = vmatpush2.bf16.msra.mxu0 0
          %436 = vmatprep.subr.bf16.mxu0 0
          %437 = vmatpush2.bf16.msra.mxu0 0
          %438 = vmatprep.subr.bf16.mxu0 0
          %439 = vmatpush2.bf16.msra.mxu0 0
          %440 = vmatprep.subr.bf16.mxu0 0
          %441 = vmatpush2.bf16.msra.mxu0 0
          %442 = vmatprep.subr.bf16.mxu0 0
          %443 = vmatpush2.bf16.msra.mxu0 0
          %444 = vmatprep.subr.bf16.mxu0 0
          %445 = vmatpush2.bf16.msra.mxu0 0
          %446 = vmatprep.subr.bf16.mxu0 0
          %447 = vmatpush2.bf16.msra.mxu0 0
          %448 = vmatprep.subr.bf16.mxu0 0
          %449 = vmatpush2.bf16.msra.mxu0 0
          %450 = vmatprep.mubr.bf16.mxu0 0
          %451 = vmatmul.mubr.bf16.gmra.mxu0 %v413
          %v452 = vpop.f32.mrf.mxu0
          %v453 = vadd.f32 %v407, %v452
          %v454 = vpop.f32.mrf.mxu0
          %v455 = vpop.f32.mrf.mxu0
          %v456 = vpop.f32.mrf.mxu0
          %457 = vdwg.mxu0
          %458 = vrot.lane.b32.xlu0 %v257, 112
          %v459 = vpop.permute.xlu0 %458
          %v461 = vsel %vm263, %v459, 0
          %463 = vmatprep.subr.bf16.mxu0 0
          %464 = vmatpush1.bf16.msra.mxu0 0
          %465 = vmatprep.subr.bf16.mxu0 0
          %466 = vmatpush1.bf16.msra.mxu0 0
          %467 = vmatprep.subr.bf16.mxu0 0
          %468 = vmatpush1.bf16.msra.mxu0 0
          %469 = vmatprep.subr.bf16.mxu0 0
          %470 = vmatpush1.bf16.msra.mxu0 0
          %471 = vmatprep.subr.bf16.mxu0 0
          %472 = vmatpush1.bf16.msra.mxu0 0
          %473 = vmatprep.subr.bf16.mxu0 0
          %474 = vmatpush1.bf16.msra.mxu0 0
          %475 = vmatprep.subr.bf16.mxu0 0
          %476 = vmatpush1.bf16.msra.mxu0 0
          %477 = vmatprep.subr.bf16.mxu0 0
          %478 = vmatpush1.bf16.msra.mxu0 %v272
          %479 = vmatprep.subr.bf16.mxu0 0
          %480 = vmatpush2.bf16.msra.mxu0 0
          %481 = vmatprep.subr.bf16.mxu0 0
          %482 = vmatpush2.bf16.msra.mxu0 0
          %483 = vmatprep.subr.bf16.mxu0 0
          %484 = vmatpush2.bf16.msra.mxu0 0
          %485 = vmatprep.subr.bf16.mxu0 0
          %486 = vmatpush2.bf16.msra.mxu0 0
          %487 = vmatprep.subr.bf16.mxu0 0
          %488 = vmatpush2.bf16.msra.mxu0 0
          %489 = vmatprep.subr.bf16.mxu0 0
          %490 = vmatpush2.bf16.msra.mxu0 0
          %491 = vmatprep.subr.bf16.mxu0 0
          %492 = vmatpush2.bf16.msra.mxu0 0
          %493 = vmatprep.subr.bf16.mxu0 0
          %494 = vmatpush2.bf16.msra.mxu0 0
          %495 = vmatprep.mubr.bf16.mxu0 0
          %496 = vmatmul.mubr.bf16.gmra.mxu0 %v461
          %v497 = vpop.f32.mrf.mxu0
          %v498 = vadd.f32 0.0, %v497
          %v499 = vpop.f32.mrf.mxu0
          %v500 = vpop.f32.mrf.mxu0
          %v501 = vpop.f32.mrf.mxu0
          %502 = vdwg.mxu0
          %v503 = vpack.c.bf16 %v498, %v498
          %s504 = scalar_lea.vmem %s1, 8
          %v505 = vld [vmem:[%s504] sm:$0xf]
          %v507 = vsel %vm364, %v505, 0
          %v510 = vsel %vm368, %v503, 0
          %512 = vmatprep.subr.bf16.mxu0 0
          %513 = vmatpush1.bf16.msra.mxu0 0
          %514 = vmatprep.subr.bf16.mxu0 0
          %515 = vmatpush1.bf16.msra.mxu0 0
          %516 = vmatprep.subr.bf16.mxu0 0
          %517 = vmatpush1.bf16.msra.mxu0 0
          %518 = vmatprep.subr.bf16.mxu0 0
          %519 = vmatpush1.bf16.msra.mxu0 0
          %520 = vmatprep.subr.bf16.mxu0 0
          %521 = vmatpush1.bf16.msra.mxu0 0
          %522 = vmatprep.subr.bf16.mxu0 0
          %523 = vmatpush1.bf16.msra.mxu0 0
          %524 = vmatprep.subr.bf16.mxu0 0
          %525 = vmatpush1.bf16.msra.mxu0 0
          %526 = vmatprep.subr.bf16.mxu0 0
          %527 = vmatpush1.bf16.msra.mxu0 %v510
          %528 = vmatprep.subr.bf16.mxu0 0
          %529 = vmatpush2.bf16.msra.mxu0 0
          %530 = vmatprep.subr.bf16.mxu0 0
          %531 = vmatpush2.bf16.msra.mxu0 0
          %532 = vmatprep.subr.bf16.mxu0 0
          %533 = vmatpush2.bf16.msra.mxu0 0
          %534 = vmatprep.subr.bf16.mxu0 0
          %535 = vmatpush2.bf16.msra.mxu0 0
          %536 = vmatprep.subr.bf16.mxu0 0
          %537 = vmatpush2.bf16.msra.mxu0 0
          %538 = vmatprep.subr.bf16.mxu0 0
          %539 = vmatpush2.bf16.msra.mxu0 0
          %540 = vmatprep.subr.bf16.mxu0 0
          %541 = vmatpush2.bf16.msra.mxu0 0
          %542 = vmatprep.subr.bf16.mxu0 0
          %543 = vmatpush2.bf16.msra.mxu0 0
          %544 = vmatprep.mubr.bf16.mxu0 0
          %545 = vmatmul.mubr.bf16.gmra.mxu0 %v507
          %v546 = vpop.f32.mrf.mxu0
          %v547 = vadd.f32 0.0, %v546
          %v548 = vpop.f32.mrf.mxu0
          %v549 = vpop.f32.mrf.mxu0
          %v550 = vpop.f32.mrf.mxu0
          %551 = vdwg.mxu0
          %v552 = vadd.f32 %v453, %v547
          %553 = vrot.lane.b32.xlu0 %v257, 111
          %v554 = vpop.permute.xlu0 %553
          %v556 = vsel %vm263, %v554, 0
          %558 = vmatprep.subr.bf16.mxu0 0
          %559 = vmatpush1.bf16.msra.mxu0 0
          %560 = vmatprep.subr.bf16.mxu0 0
          %561 = vmatpush1.bf16.msra.mxu0 0
          %562 = vmatprep.subr.bf16.mxu0 0
          %563 = vmatpush1.bf16.msra.mxu0 0
          %564 = vmatprep.subr.bf16.mxu0 0
          %565 = vmatpush1.bf16.msra.mxu0 0
          %566 = vmatprep.subr.bf16.mxu0 0
          %567 = vmatpush1.bf16.msra.mxu0 0
          %568 = vmatprep.subr.bf16.mxu0 0
          %569 = vmatpush1.bf16.msra.mxu0 0
          %570 = vmatprep.subr.bf16.mxu0 0
          %571 = vmatpush1.bf16.msra.mxu0 0
          %572 = vmatprep.subr.bf16.mxu0 0
          %573 = vmatpush1.bf16.msra.mxu0 %v272
          %574 = vmatprep.subr.bf16.mxu0 0
          %575 = vmatpush2.bf16.msra.mxu0 0
          %576 = vmatprep.subr.bf16.mxu0 0
          %577 = vmatpush2.bf16.msra.mxu0 0
          %578 = vmatprep.subr.bf16.mxu0 0
          %579 = vmatpush2.bf16.msra.mxu0 0
          %580 = vmatprep.subr.bf16.mxu0 0
          %581 = vmatpush2.bf16.msra.mxu0 0
          %582 = vmatprep.subr.bf16.mxu0 0
          %583 = vmatpush2.bf16.msra.mxu0 0
          %584 = vmatprep.subr.bf16.mxu0 0
          %585 = vmatpush2.bf16.msra.mxu0 0
          %586 = vmatprep.subr.bf16.mxu0 0
          %587 = vmatpush2.bf16.msra.mxu0 0
          %588 = vmatprep.subr.bf16.mxu0 0
          %589 = vmatpush2.bf16.msra.mxu0 0
          %590 = vmatprep.mubr.bf16.mxu0 0
          %591 = vmatmul.mubr.bf16.gmra.mxu0 %v556
          %v592 = vpop.f32.mrf.mxu0
          %v593 = vadd.f32 0.0, %v592
          %v594 = vpop.f32.mrf.mxu0
          %v595 = vpop.f32.mrf.mxu0
          %v596 = vpop.f32.mrf.mxu0
          %597 = vdwg.mxu0
          %v598 = vpack.c.bf16 %v593, %v593
          %s599 = scalar_lea.vmem %s1, 12
          %v600 = vld [vmem:[%s599] sm:$0xf]
          %v602 = vsel %vm364, %v600, 0
          %v605 = vsel %vm368, %v598, 0
          %607 = vmatprep.subr.bf16.mxu0 0
          %608 = vmatpush1.bf16.msra.mxu0 0
          %609 = vmatprep.subr.bf16.mxu0 0
          %610 = vmatpush1.bf16.msra.mxu0 0
          %611 = vmatprep.subr.bf16.mxu0 0
          %612 = vmatpush1.bf16.msra.mxu0 0
          %613 = vmatprep.subr.bf16.mxu0 0
          %614 = vmatpush1.bf16.msra.mxu0 0
          %615 = vmatprep.subr.bf16.mxu0 0
          %616 = vmatpush1.bf16.msra.mxu0 0
          %617 = vmatprep.subr.bf16.mxu0 0
          %618 = vmatpush1.bf16.msra.mxu0 0
          %619 = vmatprep.subr.bf16.mxu0 0
          %620 = vmatpush1.bf16.msra.mxu0 0
          %621 = vmatprep.subr.bf16.mxu0 0
          %622 = vmatpush1.bf16.msra.mxu0 %v605
          %623 = vmatprep.subr.bf16.mxu0 0
          %624 = vmatpush2.bf16.msra.mxu0 0
          %625 = vmatprep.subr.bf16.mxu0 0
          %626 = vmatpush2.bf16.msra.mxu0 0
          %627 = vmatprep.subr.bf16.mxu0 0
          %628 = vmatpush2.bf16.msra.mxu0 0
          %629 = vmatprep.subr.bf16.mxu0 0
          %630 = vmatpush2.bf16.msra.mxu0 0
          %631 = vmatprep.subr.bf16.mxu0 0
          %632 = vmatpush2.bf16.msra.mxu0 0
          %633 = vmatprep.subr.bf16.mxu0 0
          %634 = vmatpush2.bf16.msra.mxu0 0
          %635 = vmatprep.subr.bf16.mxu0 0
          %636 = vmatpush2.bf16.msra.mxu0 0
          %637 = vmatprep.subr.bf16.mxu0 0
          %638 = vmatpush2.bf16.msra.mxu0 0
          %639 = vmatprep.mubr.bf16.mxu0 0
          %640 = vmatmul.mubr.bf16.gmra.mxu0 %v602
          %v641 = vpop.f32.mrf.mxu0
          %v642 = vadd.f32 0.0, %v641
          %v643 = vpop.f32.mrf.mxu0
          %v644 = vpop.f32.mrf.mxu0
          %v645 = vpop.f32.mrf.mxu0
          %646 = vdwg.mxu0
          %v647 = vadd.f32 %v552, %v642
          %649 = vset.pattern.permute.xlu0 0
          %650 = vperm.xlu0 %649, %v224
          %v651 = vpop.permute.xlu0 %650
          %v653 = vadd.f32 %v647, %v651
          %v654 = vmax.f32 %v653, 0.0
          %v656 = vcombine.high %v654, %v654
          %v658 = vunpack.c.l.s4 1966171168
          %v659 = vunpack.c.0.s8 %v658
          %v660 = vlaneseq
          %v661 = vshrl.u32 %v660, 7
          %v662 = vsub.s32 %v659, %v661
          %v663 = vrot.slane %v654, %v662
          %v665 = vunpack.c.l.s4 1966171168
          %v666 = vunpack.c.0.s8 %v665
          %v667 = vlaneseq
          %v668 = vshrl.u32 %v667, 7
          %v669 = vsub.s32 %v666, %v668
          %v670 = vrot.slane %v656, %v669
          %v671 = vcombine.high %v663, %v663
          %v672 = vcombine.high %v670, %v670
          %v674 = vunpack.c.l.s4 1966171168
          %v675 = vunpack.c.0.s8 %v674
          %v676 = vlaneseq
          %v677 = vshrl.u32 %v676, 7
          %v678 = vsub.s32 %v675, %v677
          %v679 = vrot.slane %v663, %v678
          %v681 = vunpack.c.l.s4 1966171168
          %v682 = vunpack.c.0.s8 %v681
          %v683 = vlaneseq
          %v684 = vshrl.u32 %v683, 7
          %v685 = vsub.s32 %v682, %v684
          %v686 = vrot.slane %v670, %v685
          %v688 = vunpack.c.l.s4 1966171168
          %v689 = vunpack.c.0.s8 %v688
          %v690 = vlaneseq
          %v691 = vshrl.u32 %v690, 7
          %v692 = vsub.s32 %v689, %v691
          %v693 = vrot.slane %v671, %v692
          %v695 = vunpack.c.l.s4 1966171168
          %v696 = vunpack.c.0.s8 %v695
          %v697 = vlaneseq
          %v698 = vshrl.u32 %v697, 7
          %v699 = vsub.s32 %v696, %v698
          %v700 = vrot.slane %v672, %v699
          %v701 = vcombine.high %v679, %v679
          %v702 = vcombine.high %v686, %v686
          %v703 = vcombine.high %v693, %v693
          %v704 = vcombine.high %v700, %v700
          %s713 = scalar_lea.vmem %s212, %s226 [#allocation2]
          %vm714 = vcmask 57344
          %715 = vst.msk [vmem:[%s713] sm:$0x1] %vm714, %v679
          %716 = vst.msk [vmem:[%s713 + $0x8] sm:$0x1] %vm714, %v693
          %717 = vst.msk [vmem:[%s713 + $0x10] sm:$0x1] %vm714, %v701
          %718 = vst.msk [vmem:[%s713 + $0x18] sm:$0x1] %vm714, %v703
          %719 = vst.msk [vmem:[%s713 + $0x20] sm:$0x1] %vm714, %v686
          %720 = vst.msk [vmem:[%s713 + $0x28] sm:$0x1] %vm714, %v700
          %721 = vst.msk [vmem:[%s713 + $0x30] sm:$0x1] %vm714, %v702
          %722 = vst.msk [vmem:[%s713 + $0x38] sm:$0x1] %vm714, %v704
        $region41: #{downconv.1} parent=35 // loop_footer
          %s230 = sadd.s32 1, %s226
        $region42: #{downconv.1} parent=35 // loop_footer_branch
          %225 = sbr.rel target = $region38
        $region43: #{downconv.1} parent=35 // loop_exit
          _
        %s723 = sand.u32 %s131, 1
        %s724 = scalar_lea.sflag [#allocation3], %s723
        %s725 = sand.u32 %s131, 1
        %s726 = smul.addr %s725, 64
        %s727 = scalar_lea.vmem [#allocation2], %s726
        // Predicated region
        $region44: #{downconv.1} parent=35 // pred_check
          %p728 = pneg %p141
        $region45: #{downconv.1} parent=35 // pred_check_branch
          %730 = sbr.rel (%p728) target = $region47
        $region46: #{downconv.1} parent=35 // pred_region
          %s732 = ssub.s32 1024, 1024
          %733 = vsyncadd %s724, %s732
          %s734 = smul.addr %s22, 8
          %s735 = sadd.s32 %s23, %s734
          %s736 = smul.addr %s735, 128
          %s737 = scalar_lea.hbm %s4, %s736
          %s738 = sshll.u32 %s727, 4
          %s739 = int_to_ptr.vmem [resolvable:$true] %s738
          %744 = dma.vmem_to_hbm [thread:$0]  %s739, 1024, %s737, %s724, 128, 128, 8
        $region47: #{downconv.1} parent=35 // pred_fallthru
          _
      $region36: #{downconv.1} parent=5 // pred_fallthru
        _
      %p745 = scmp.le.s32.totalorder 2, %s13
      // Predicated region
      $region48: #{downconv.1} parent=5 // pred_check
        %p746 = pneg %p745
      $region49: #{downconv.1} parent=5 // pred_check_branch
        %748 = sbr.rel (%p746) target = $region51
      $region50: #{downconv.1} parent=5 // pred_region
        %s749 = ssub.s32 %s13, 2
        // Predicated region
        $region52: #{downconv.1} parent=50 // pred_check
          %p750 = pneg %p147
        $region53: #{downconv.1} parent=50 // pred_check_branch
          %752 = sbr.rel (%p750) target = $region55
        $region54: #{downconv.1} parent=50 // pred_region
          %s753 = sand.u32 %s132, 1
          %s754 = scalar_lea.sflag [#allocation3], %s753
          %s755 = sand.u32 %s132, 1
          %s756 = smul.addr %s755, 64
          %s757 = scalar_lea.vmem [#allocation2], %s756
          %758 = dma.done %s754, 1024
        $region55: #{downconv.1} parent=50 // pred_fallthru
          _
      $region51: #{downconv.1} parent=5 // pred_fallthru
        _
    $region6: #{downconv.1} parent=1 // loop_footer
      %s17 = sadd.s32 1, %s13
    $region7: #{downconv.1} parent=1 // loop_footer_branch
      %12 = sbr.rel target = $region3
    $region8: #{downconv.1} parent=1 // loop_exit
      _
    %759 = vsyncpa [#allocation3], 1
    %s760 = scalar_lea.sflag [#allocation3], 1
    %761 = vsyncpa %s760, 1

</llo_original>
